<compile_context>
chip_gen: v6e
topology: v6e:2x2x1
jax: 0.10.0
libtpu: 0.0.40
codegen_flags: <defaults>
</compile_context>

<pallas_src>
import functools

import jax
import jax.numpy as jnp
import numpy as np
from jax.experimental import pallas as pl
from jax.experimental.pallas import tpu as pltpu


def _dino_loss_kernel(scalars_ref,      # SMEM (3,): [1/teacher_temp, 1/student_temp, center_momentum]
                      student_ref,      # VMEM (C, batch, D): C student crops for this step
                      teacher_ref,      # VMEM (2, batch, D): teacher output (resident)
                      center_ref,       # VMEM (1, D): current center (resident)
                      loss_ref,         # SMEM (1, 1) output: scalar loss
                      new_center_ref,   # VMEM (1, D) output: EMA-updated center
                      w_ref,            # VMEM scratch (2, batch, D): [q0+q1, q0]
                      acc_ref,          # VMEM scratch (batch, 1): per-row loss accumulator
                      *, ncrops, batch, crops_per_step, n_steps):
    pid = pl.program_id(0)
    inv_t = scalars_ref[0]            # 1 / teacher_temp
    inv_st = scalars_ref[1]           # 1 / student_temp
    center_momentum = scalars_ref[2]

    # ---- first step: teacher softmax, CE weight slabs, EMA center update ----
    @pl.when(pid == 0)
    def _init():
        teacher = teacher_ref[...].astype(jnp.float32)            # (2, batch, D)
        center = center_ref[...].astype(jnp.float32)              # (1, D)
        t_logits = (teacher - center[jnp.newaxis]) * inv_t
        t_max = jnp.max(t_logits, axis=-1, keepdims=True)
        t_exp = jnp.exp(t_logits - t_max)
        t_soft = t_exp * pl.reciprocal(jnp.sum(t_exp, axis=-1, keepdims=True))
        q0 = t_soft[0]
        q1 = t_soft[1]
        # Two slabs only: generic pair weight (q0+q1) and q0.
        w_ref[0] = q0 + q1
        w_ref[1] = q0
        acc_ref[...] = jnp.zeros_like(acc_ref)
        # EMA center update here (depends only on teacher & center), so the
        # epilogue after the last crop carries no (2, batch, D) re-load.
        # TODO(synk): under data parallelism DINO all-reduces batch_center
        # across replicas before the EMA; single-device here.
        batch_center = jnp.sum(teacher, axis=(0, 1)) * (1.0 / (2 * batch))
        new_center_ref[...] = (center * center_momentum
                               + batch_center[jnp.newaxis, :]
                               * (1.0 - center_momentum))

    # ---- every step: student softmax stats + CE accumulation ----------------
    # Static (unrolled) loop over this step's crops; equivalent to
    # lax.fori_loop(..., unroll=True) at these trip counts.
    for c in range(crops_per_step):
        s = student_ref[c].astype(jnp.float32) * inv_st           # (batch, D)
        s_max = jnp.max(s, axis=-1, keepdims=True)
        s_shift = s - s_max
        s_lse = jnp.log(jnp.sum(jnp.exp(s_shift), axis=-1, keepdims=True))

        # Generic contribution (crop pairs with both teacher views):
        #   loss_v = 2*lse - sum(q_sum * s_shift)   [logsumexp CE form]
        q_sum = w_ref[0]
        acc_ref[...] += (2.0 * s_lse
                         - jnp.sum(q_sum * s_shift, axis=-1, keepdims=True))

        def _corr0(s_shift=s_shift, s_lse=s_lse):
            # crop 0 skips teacher view 0: remove the q0 term and one lse.
            acc_ref[...] += (jnp.sum(w_ref[1] * s_shift, axis=-1, keepdims=True)
                             - s_lse)

        def _corr1(s_shift=s_shift, s_lse=s_lse):
            # crop 1 skips teacher view 1: remove the q1 term and one lse.
            q1 = w_ref[0] - w_ref[1]
            acc_ref[...] += (jnp.sum(q1 * s_shift, axis=-1, keepdims=True)
                             - s_lse)

        if n_steps == 1:
            # Crop index is fully static -> no runtime branch at all.
            if c == 0:
                _corr0()
            elif c == 1:
                _corr1()
        else:
            v = pid * crops_per_step + c
            pl.when(v == 0)(_corr0)
            pl.when(v == 1)(_corr1)

    # ---- last step: reduce accumulator to the scalar loss -------------------
    @pl.when(pid == n_steps - 1)
    def _finalize():
        n_loss_terms = 2 * (ncrops - 1)
        loss_ref[0, 0] = jnp.sum(acc_ref[...]) * (1.0 / (n_loss_terms * batch))


def _device_vmem_bytes():
    try:
        return int(pltpu.get_tpu_info().vmem_capacity_bytes)
    except Exception:
        return 64 * 1024 * 1024   # conservative fallback (v7x per-TC VMEM)


def _vmem_need_bytes(crops_per_step, batch, out_dim):
    f32 = 4
    student = 2 * crops_per_step * batch * out_dim * f32   # double-buffered crop block
    teacher = 2 * 2 * batch * out_dim * f32                # counted at 2 bufs (worst case)
    weights = 2 * batch * out_dim * f32                    # q_sum / q0 scratch
    center = 4 * out_dim * f32                             # center in + new_center out
    acc = max(batch, 8) * 128 * f32                        # padded (batch, 1) accumulator
    return student + teacher + weights + center + acc


def dino_loss(student_output, teacher_output, center, epoch, *,
              ncrops, teacher_temp_schedule,
              student_temp=0.1, center_momentum=0.9):
    """Returns (loss_scalar, new_center), matching OriginalDINOLoss.forward
    plus the updated `center` buffer."""
    n_student, out_dim = student_output.shape
    n_teacher, _ = teacher_output.shape
    assert n_student % ncrops == 0 and n_teacher % 2 == 0
    batch = n_student // ncrops
    assert n_teacher == 2 * batch
    assert ncrops >= 2
    # NOTE: for sub-32-bit inputs `batch` would have to be a multiple of the
    # packed sublane count (16 for bf16, 32 for int8/fp8); inputs here are f32.

    # Teacher temperature from the host-side schedule; the kernel receives the
    # reciprocals as runtime SMEM scalars (no recompiles during warmup, no
    # per-element divides on the EUP).
    temp = float(teacher_temp_schedule[epoch])
    scalars = jnp.array([1.0 / temp, 1.0 / student_temp, center_momentum],
                        jnp.float32)

    # (crop, batch, D) layout: per-crop blocks are whole, aligned slabs.
    student3 = student_output.reshape(ncrops, batch, out_dim)
    teacher3 = teacher_output.reshape(2, batch, out_dim)

    # --- VMEM budget + grid fattening (fewer, fatter steps at small shapes) ---
    vmem_cap = _device_vmem_bytes()
    budget = int(0.75 * vmem_cap)
    crops_per_step = 1
    for c in range(1, ncrops + 1):
        if ncrops % c == 0 and _vmem_need_bytes(c, batch, out_dim) <= budget // 2:
            crops_per_step = c
    n_steps = ncrops // crops_per_step
    need = _vmem_need_bytes(crops_per_step, batch, out_dim)
    vmem_limit = int(min(budget, max(32 * 1024 * 1024, int(1.25 * need))))

    kernel = functools.partial(_dino_loss_kernel, ncrops=ncrops, batch=batch,
                               crops_per_step=crops_per_step, n_steps=n_steps)

    cost = pl.CostEstimate(
        flops=8 * (ncrops + 2) * batch * out_dim,
        transcendentals=(ncrops + 2) * batch * out_dim,
        bytes_accessed=4 * ((ncrops + 2) * batch * out_dim + 2 * out_dim + 4),
    )

    # Constant-index (resident) blocks don't need double buffering once the
    # grid has more than one step.
    resident = dict(pipeline_mode=pl.Buffered(1)) if n_steps > 1 else {}

    grid_spec = pltpu.PrefetchScalarGridSpec(
        num_scalar_prefetch=0,
        grid=(n_steps,),
        in_specs=[
            pl.BlockSpec(memory_space=pltpu.SMEM),                      # scalars
            pl.BlockSpec((crops_per_step, batch, out_dim),
                         lambda i: (i, 0, 0)),                          # student crops
            pl.BlockSpec((2, batch, out_dim), lambda i: (0, 0, 0),
                         **resident),                                   # teacher (resident)
            pl.BlockSpec((1, out_dim), lambda i: (0, 0), **resident),   # center (resident)
        ],
        out_specs=(
            pl.BlockSpec((1, 1), lambda i: (0, 0), memory_space=pltpu.SMEM),
            pl.BlockSpec((1, out_dim), lambda i: (0, 0)),
        ),
        scratch_shapes=[
            pltpu.VMEM((2, batch, out_dim), jnp.float32),   # [q0+q1, q0]
            pltpu.VMEM((batch, 1), jnp.float32),            # per-row loss accumulator
        ],
    )

    loss, new_center = pl.pallas_call(
        kernel,
        grid_spec=grid_spec,
        out_shape=(
            jax.ShapeDtypeStruct((1, 1), jnp.float32),
            jax.ShapeDtypeStruct((1, out_dim), jnp.float32),
        ),
        compiler_params=pltpu.CompilerParams(
            # The crop axis carries the loss accumulator -> reduction axis.
            dimension_semantics=("arbitrary",),
            vmem_limit_bytes=vmem_limit,
        ),
        cost_estimate=cost,
    )(scalars, student3, teacher3, center)
    return loss[0, 0], new_center


def _dino_loss_ref(student_output, teacher_output, center, epoch, *,
                   ncrops, teacher_temp_schedule,
                   student_temp=0.1, center_momentum=0.9):
    """Pure-JAX reference mirroring the PyTorch module."""
    temp = float(teacher_temp_schedule[epoch])
    student_out = jnp.split(student_output / student_temp, ncrops, axis=0)
    teacher_soft = jax.nn.softmax((teacher_output - center) / temp, axis=-1)
    teacher_out = jnp.split(teacher_soft, 2, axis=0)
    total, n = 0.0, 0
    for iq, q in enumerate(teacher_out):
        for v in range(ncrops):
            if v == iq:
                continue
            s_out = jax.nn.log_softmax(student_out[v], axis=-1)
            total += jnp.mean(jnp.sum(-q * s_out, axis=-1))
            n += 1
    total = total / n
    batch_center = (jnp.sum(teacher_output, axis=0, keepdims=True)
                    / teacher_output.shape[0])
    new_center = center * center_momentum + batch_center * (1 - center_momentum)
    return total, new_center


if __name__ == "__main__":
    # Module config (synthetic, deterministic, small shapes).
    out_dim = 128
    ncrops = 4
    batch = 8
    warmup_teacher_temp = 0.04
    teacher_temp = 0.07
    warmup_teacher_temp_epochs = 3
    nepochs = 10
    epoch = 1

    teacher_temp_schedule = np.concatenate((
        np.linspace(warmup_teacher_temp, teacher_temp, warmup_teacher_temp_epochs),
        np.ones(nepochs - warmup_teacher_temp_epochs) * teacher_temp,
    ))

    key = jax.random.PRNGKey(0)
    k1, k2 = jax.random.split(key)
    student_output = jax.random.normal(k1, (ncrops * batch, out_dim), jnp.float32)
    teacher_output = jax.random.normal(k2, (2 * batch, out_dim), jnp.float32)
    center = jnp.zeros((1, out_dim), jnp.float32)  # register_buffer('center', zeros)

    loss, new_center = dino_loss(
        student_output, teacher_output, center, epoch,
        ncrops=ncrops, teacher_temp_schedule=teacher_temp_schedule)
    loss = jax.block_until_ready(loss)
    new_center = jax.block_until_ready(new_center)

    ref_loss, ref_center = _dino_loss_ref(
        student_output, teacher_output, center, epoch,
        ncrops=ncrops, teacher_temp_schedule=teacher_temp_schedule)

    assert np.allclose(np.asarray(loss), np.asarray(ref_loss), rtol=1e-5, atol=1e-5), \
        (float(loss), float(ref_loss))
    assert np.allclose(np.asarray(new_center), np.asarray(ref_center),
                       rtol=1e-5, atol=1e-6)
    print("KERNEL_OK")
</pallas_src>

<mosaic_0001>
module attributes {stable_mosaic.version = 11 : i64} {
  func.func @_dino_loss_kernel(%arg0: i32, %arg1: memref<3xf32, #tpu.memory_space<smem>>, %arg2: memref<4x8x128xf32, #tpu.memory_space<vmem>>, %arg3: memref<2x8x128xf32, #tpu.memory_space<vmem>>, %arg4: memref<1x128xf32, #tpu.memory_space<vmem>>, %arg5: memref<1x1xf32, #tpu.memory_space<smem>>, %arg6: memref<1x128xf32, #tpu.memory_space<vmem>>, %arg7: memref<2x8x128xf32, #tpu.memory_space<vmem>>, %arg8: memref<8x1xf32, #tpu.memory_space<vmem>>) attributes {dimension_semantics = [#tpu.dimension_semantics<arbitrary>], iteration_bounds = array<i64: 1>, scalar_prefetch = 0 : i64, scratch_operands = 2 : i64, tpu.core_type = #tpu.core_type<tc>, window_params = [{transform_indices = @transform_0, window_bounds = array<i64: 3>}, {transform_indices = @transform_1, window_bounds = array<i64: 4, 8, 128>}, {pipeline_mode = #tpu.pipeline_mode<synchronous>, transform_indices = @transform_2, window_bounds = array<i64: 2, 8, 128>}, {pipeline_mode = #tpu.pipeline_mode<synchronous>, transform_indices = @transform_3, window_bounds = array<i64: 1, 128>}, {transform_indices = @transform_4, window_bounds = array<i64: 1, 1>}, {pipeline_mode = #tpu.pipeline_mode<synchronous>, transform_indices = @transform_5, window_bounds = array<i64: 1, 128>}]} {
    %c0 = arith.constant 0 : index
    %0 = memref.load %arg1[%c0] : memref<3xf32, #tpu.memory_space<smem>>
    %c1 = arith.constant 1 : index
    %1 = memref.load %arg1[%c1] : memref<3xf32, #tpu.memory_space<smem>>
    %c2 = arith.constant 2 : index
    %2 = memref.load %arg1[%c2] : memref<3xf32, #tpu.memory_space<smem>>
    %c0_i32 = arith.constant 0 : i32
    %3 = arith.cmpi eq, %arg0, %c0_i32 : i32
    %4 = arith.extui %3 : i1 to i32
    %c0_i32_0 = arith.constant 0 : i32
    %5 = arith.cmpi ne, %4, %c0_i32_0 : i32
    scf.if %5 {
      %c0_76 = arith.constant 0 : index
      %c0_77 = arith.constant 0 : index
      %c0_78 = arith.constant 0 : index
      %122 = vector.load %arg3[%c0_76, %c0_77, %c0_78] : memref<2x8x128xf32, #tpu.memory_space<vmem>>, vector<2x8x128xf32>
      %c0_79 = arith.constant 0 : index
      %c0_80 = arith.constant 0 : index
      %123 = vector.load %arg4[%c0_79, %c0_80] : memref<1x128xf32, #tpu.memory_space<vmem>>, vector<1x128xf32>
      %124 = vector.shape_cast %123 : vector<1x128xf32> to vector<1x1x128xf32>
      %125 = vector.broadcast %124 : vector<1x1x128xf32> to vector<2x8x128xf32>
      %126 = arith.subf %122, %125 : vector<2x8x128xf32>
      %127 = vector.broadcast %0 : f32 to vector<2x8x128xf32>
      %128 = arith.mulf %126, %127 : vector<2x8x128xf32>
      %cst_81 = arith.constant dense<0xFF800000> : vector<2x8xf32>
      %129 = vector.multi_reduction <maximumf>, %128, %cst_81 [2] : vector<2x8x128xf32> to vector<2x8xf32>
      %130 = vector.shape_cast %129 : vector<2x8xf32> to vector<2x8x1xf32>
      %131 = vector.broadcast %130 : vector<2x8x1xf32> to vector<2x8x128xf32>
      %132 = arith.subf %128, %131 : vector<2x8x128xf32>
      %133 = math.exp %132 : vector<2x8x128xf32>
      %cst_82 = arith.constant dense<0.000000e+00> : vector<2x8xf32>
      %134 = vector.multi_reduction <add>, %133, %cst_82 [2] : vector<2x8x128xf32> to vector<2x8xf32>
      %135 = vector.shape_cast %134 : vector<2x8xf32> to vector<2x8x1xf32>
      %136 = tpu.reciprocal %135 : vector<2x8x1xf32> -> vector<2x8x1xf32>
      %137 = vector.broadcast %136 : vector<2x8x1xf32> to vector<2x8x128xf32>
      %138 = arith.mulf %133, %137 : vector<2x8x128xf32>
      %139 = vector.extract_strided_slice %138 {offsets = [0, 0, 0], sizes = [1, 8, 128], strides = [1, 1, 1]} : vector<2x8x128xf32> to vector<1x8x128xf32>
      %140 = vector.shape_cast %139 : vector<1x8x128xf32> to vector<8x128xf32>
      %141 = vector.extract_strided_slice %138 {offsets = [1, 0, 0], sizes = [1, 8, 128], strides = [1, 1, 1]} : vector<2x8x128xf32> to vector<1x8x128xf32>
      %142 = vector.shape_cast %141 : vector<1x8x128xf32> to vector<8x128xf32>
      %143 = arith.addf %140, %142 : vector<8x128xf32>
      %c0_83 = arith.constant 0 : index
      %c0_84 = arith.constant 0 : index
      %c0_85 = arith.constant 0 : index
      %144 = vector.load %arg7[%c0_83, %c0_84, %c0_85] : memref<2x8x128xf32, #tpu.memory_space<vmem>>, vector<1x8x128xf32>
      %145 = vector.shape_cast %144 : vector<1x8x128xf32> to vector<8x128xf32>
      %146 = vector.shape_cast %143 : vector<8x128xf32> to vector<1x8x128xf32>
      tpu.vector_store %arg7[%c0_83, %c0_84, %c0_85], %146 {strides = array<i32>} : memref<2x8x128xf32, #tpu.memory_space<vmem>>, vector<1x8x128xf32>,
      %c1_86 = arith.constant 1 : index
      %c0_87 = arith.constant 0 : index
      %c0_88 = arith.constant 0 : index
      %147 = vector.load %arg7[%c1_86, %c0_87, %c0_88] : memref<2x8x128xf32, #tpu.memory_space<vmem>>, vector<1x8x128xf32>
      %148 = vector.shape_cast %147 : vector<1x8x128xf32> to vector<8x128xf32>
      %149 = vector.shape_cast %140 : vector<8x128xf32> to vector<1x8x128xf32>
      tpu.vector_store %arg7[%c1_86, %c0_87, %c0_88], %149 {strides = array<i32>} : memref<2x8x128xf32, #tpu.memory_space<vmem>>, vector<1x8x128xf32>,
      %cst_89 = arith.constant 0.000000e+00 : f32
      %150 = vector.broadcast %cst_89 : f32 to vector<8x1xf32>
      %c0_90 = arith.constant 0 : index
      %c0_91 = arith.constant 0 : index
      %151 = vector.load %arg8[%c0_90, %c0_91] : memref<8x1xf32, #tpu.memory_space<vmem>>, vector<8x1xf32>
      tpu.vector_store %arg8[%c0_90, %c0_91], %150 {strides = array<i32>} : memref<8x1xf32, #tpu.memory_space<vmem>>, vector<8x1xf32>,
      %cst_92 = arith.constant dense<0.000000e+00> : vector<128xf32>
      %152 = vector.multi_reduction <add>, %122, %cst_92 [0, 1] : vector<2x8x128xf32> to vector<128xf32>
      %cst_93 = arith.constant 6.250000e-02 : f32
      %153 = vector.broadcast %cst_93 : f32 to vector<128xf32>
      %154 = arith.mulf %152, %153 : vector<128xf32>
      %155 = vector.broadcast %2 : f32 to vector<1x128xf32>
      %156 = arith.mulf %123, %155 : vector<1x128xf32>
      %157 = vector.shape_cast %154 : vector<128xf32> to vector<1x128xf32>
      %cst_94 = arith.constant 1.000000e+00 : f32
      %158 = arith.subf %cst_94, %2 : f32
      %159 = vector.broadcast %158 : f32 to vector<1x128xf32>
      %160 = arith.mulf %157, %159 : vector<1x128xf32>
      %161 = arith.addf %156, %160 : vector<1x128xf32>
      %c0_95 = arith.constant 0 : index
      %c0_96 = arith.constant 0 : index
      %162 = vector.load %arg6[%c0_95, %c0_96] : memref<1x128xf32, #tpu.memory_space<vmem>>, vector<1x128xf32>
      tpu.vector_store %arg6[%c0_95, %c0_96], %161 {strides = array<i32>} : memref<1x128xf32, #tpu.memory_space<vmem>>, vector<1x128xf32>,
    } else {
    }
    %c0_1 = arith.constant 0 : index
    %c0_2 = arith.constant 0 : index
    %c0_3 = arith.constant 0 : index
    %6 = vector.load %arg2[%c0_1, %c0_2, %c0_3] : memref<4x8x128xf32, #tpu.memory_space<vmem>>, vector<1x8x128xf32>
    %7 = vector.shape_cast %6 : vector<1x8x128xf32> to vector<8x128xf32>
    %8 = vector.broadcast %1 : f32 to vector<8x128xf32>
    %9 = arith.mulf %7, %8 : vector<8x128xf32>
    %cst = arith.constant dense<0xFF800000> : vector<8xf32>
    %10 = vector.multi_reduction <maximumf>, %9, %cst [1] : vector<8x128xf32> to vector<8xf32>
    %11 = vector.shape_cast %10 : vector<8xf32> to vector<8x1xf32>
    %12 = vector.broadcast %11 : vector<8x1xf32> to vector<8x128xf32>
    %13 = arith.subf %9, %12 : vector<8x128xf32>
    %14 = math.exp %13 : vector<8x128xf32>
    %cst_4 = arith.constant dense<0.000000e+00> : vector<8xf32>
    %15 = vector.multi_reduction <add>, %14, %cst_4 [1] : vector<8x128xf32> to vector<8xf32>
    %16 = vector.shape_cast %15 : vector<8xf32> to vector<8x1xf32>
    %17 = math.log %16 : vector<8x1xf32>
    %c0_5 = arith.constant 0 : index
    %c0_6 = arith.constant 0 : index
    %c0_7 = arith.constant 0 : index
    %18 = vector.load %arg7[%c0_5, %c0_6, %c0_7] : memref<2x8x128xf32, #tpu.memory_space<vmem>>, vector<1x8x128xf32>
    %19 = vector.shape_cast %18 : vector<1x8x128xf32> to vector<8x128xf32>
    %c0_8 = arith.constant 0 : index
    %c0_9 = arith.constant 0 : index
    %20 = vector.load %arg8[%c0_8, %c0_9] : memref<8x1xf32, #tpu.memory_space<vmem>>, vector<8x1xf32>
    %cst_10 = arith.constant 2.000000e+00 : f32
    %21 = vector.broadcast %cst_10 : f32 to vector<8x1xf32>
    %22 = arith.mulf %21, %17 : vector<8x1xf32>
    %23 = arith.mulf %19, %13 : vector<8x128xf32>
    %cst_11 = arith.constant dense<0.000000e+00> : vector<8xf32>
    %24 = vector.multi_reduction <add>, %23, %cst_11 [1] : vector<8x128xf32> to vector<8xf32>
    %25 = vector.shape_cast %24 : vector<8xf32> to vector<8x1xf32>
    %26 = arith.subf %22, %25 : vector<8x1xf32>
    %27 = arith.addf %20, %26 : vector<8x1xf32>
    %c0_12 = arith.constant 0 : index
    %c0_13 = arith.constant 0 : index
    %28 = vector.load %arg8[%c0_12, %c0_13] : memref<8x1xf32, #tpu.memory_space<vmem>>, vector<8x1xf32>
    tpu.vector_store %arg8[%c0_12, %c0_13], %27 {strides = array<i32>} : memref<8x1xf32, #tpu.memory_space<vmem>>, vector<8x1xf32>,
    %c0_14 = arith.constant 0 : index
    %c0_15 = arith.constant 0 : index
    %29 = vector.load %arg8[%c0_14, %c0_15] : memref<8x1xf32, #tpu.memory_space<vmem>>, vector<8x1xf32>
    %c1_16 = arith.constant 1 : index
    %c0_17 = arith.constant 0 : index
    %c0_18 = arith.constant 0 : index
    %30 = vector.load %arg7[%c1_16, %c0_17, %c0_18] : memref<2x8x128xf32, #tpu.memory_space<vmem>>, vector<1x8x128xf32>
    %31 = vector.shape_cast %30 : vector<1x8x128xf32> to vector<8x128xf32>
    %32 = arith.mulf %31, %13 : vector<8x128xf32>
    %cst_19 = arith.constant dense<0.000000e+00> : vector<8xf32>
    %33 = vector.multi_reduction <add>, %32, %cst_19 [1] : vector<8x128xf32> to vector<8xf32>
    %34 = vector.shape_cast %33 : vector<8xf32> to vector<8x1xf32>
    %35 = arith.subf %34, %17 : vector<8x1xf32>
    %36 = arith.addf %29, %35 : vector<8x1xf32>
    %c0_20 = arith.constant 0 : index
    %c0_21 = arith.constant 0 : index
    %37 = vector.load %arg8[%c0_20, %c0_21] : memref<8x1xf32, #tpu.memory_space<vmem>>, vector<8x1xf32>
    tpu.vector_store %arg8[%c0_20, %c0_21], %36 {strides = array<i32>} : memref<8x1xf32, #tpu.memory_space<vmem>>, vector<8x1xf32>,
    %c1_22 = arith.constant 1 : index
    %c0_23 = arith.constant 0 : index
    %c0_24 = arith.constant 0 : index
    %38 = vector.load %arg2[%c1_22, %c0_23, %c0_24] : memref<4x8x128xf32, #tpu.memory_space<vmem>>, vector<1x8x128xf32>
    %39 = vector.shape_cast %38 : vector<1x8x128xf32> to vector<8x128xf32>
    %40 = vector.broadcast %1 : f32 to vector<8x128xf32>
    %41 = arith.mulf %39, %40 : vector<8x128xf32>
    %cst_25 = arith.constant dense<0xFF800000> : vector<8xf32>
    %42 = vector.multi_reduction <maximumf>, %41, %cst_25 [1] : vector<8x128xf32> to vector<8xf32>
    %43 = vector.shape_cast %42 : vector<8xf32> to vector<8x1xf32>
    %44 = vector.broadcast %43 : vector<8x1xf32> to vector<8x128xf32>
    %45 = arith.subf %41, %44 : vector<8x128xf32>
    %46 = math.exp %45 : vector<8x128xf32>
    %cst_26 = arith.constant dense<0.000000e+00> : vector<8xf32>
    %47 = vector.multi_reduction <add>, %46, %cst_26 [1] : vector<8x128xf32> to vector<8xf32>
    %48 = vector.shape_cast %47 : vector<8xf32> to vector<8x1xf32>
    %49 = math.log %48 : vector<8x1xf32>
    %c0_27 = arith.constant 0 : index
    %c0_28 = arith.constant 0 : index
    %c0_29 = arith.constant 0 : index
    %50 = vector.load %arg7[%c0_27, %c0_28, %c0_29] : memref<2x8x128xf32, #tpu.memory_space<vmem>>, vector<1x8x128xf32>
    %51 = vector.shape_cast %50 : vector<1x8x128xf32> to vector<8x128xf32>
    %c0_30 = arith.constant 0 : index
    %c0_31 = arith.constant 0 : index
    %52 = vector.load %arg8[%c0_30, %c0_31] : memref<8x1xf32, #tpu.memory_space<vmem>>, vector<8x1xf32>
    %cst_32 = arith.constant 2.000000e+00 : f32
    %53 = vector.broadcast %cst_32 : f32 to vector<8x1xf32>
    %54 = arith.mulf %53, %49 : vector<8x1xf32>
    %55 = arith.mulf %51, %45 : vector<8x128xf32>
    %cst_33 = arith.constant dense<0.000000e+00> : vector<8xf32>
    %56 = vector.multi_reduction <add>, %55, %cst_33 [1] : vector<8x128xf32> to vector<8xf32>
    %57 = vector.shape_cast %56 : vector<8xf32> to vector<8x1xf32>
    %58 = arith.subf %54, %57 : vector<8x1xf32>
    %59 = arith.addf %52, %58 : vector<8x1xf32>
    %c0_34 = arith.constant 0 : index
    %c0_35 = arith.constant 0 : index
    %60 = vector.load %arg8[%c0_34, %c0_35] : memref<8x1xf32, #tpu.memory_space<vmem>>, vector<8x1xf32>
    tpu.vector_store %arg8[%c0_34, %c0_35], %59 {strides = array<i32>} : memref<8x1xf32, #tpu.memory_space<vmem>>, vector<8x1xf32>,
    %c0_36 = arith.constant 0 : index
    %c0_37 = arith.constant 0 : index
    %c0_38 = arith.constant 0 : index
    %61 = vector.load %arg7[%c0_36, %c0_37, %c0_38] : memref<2x8x128xf32, #tpu.memory_space<vmem>>, vector<1x8x128xf32>
    %62 = vector.shape_cast %61 : vector<1x8x128xf32> to vector<8x128xf32>
    %c1_39 = arith.constant 1 : index
    %c0_40 = arith.constant 0 : index
    %c0_41 = arith.constant 0 : index
    %63 = vector.load %arg7[%c1_39, %c0_40, %c0_41] : memref<2x8x128xf32, #tpu.memory_space<vmem>>, vector<1x8x128xf32>
    %64 = vector.shape_cast %63 : vector<1x8x128xf32> to vector<8x128xf32>
    %65 = arith.subf %62, %64 : vector<8x128xf32>
    %c0_42 = arith.constant 0 : index
    %c0_43 = arith.constant 0 : index
    %66 = vector.load %arg8[%c0_42, %c0_43] : memref<8x1xf32, #tpu.memory_space<vmem>>, vector<8x1xf32>
    %67 = arith.mulf %65, %45 : vector<8x128xf32>
    %cst_44 = arith.constant dense<0.000000e+00> : vector<8xf32>
    %68 = vector.multi_reduction <add>, %67, %cst_44 [1] : vector<8x128xf32> to vector<8xf32>
    %69 = vector.shape_cast %68 : vector<8xf32> to vector<8x1xf32>
    %70 = arith.subf %69, %49 : vector<8x1xf32>
    %71 = arith.addf %66, %70 : vector<8x1xf32>
    %c0_45 = arith.constant 0 : index
    %c0_46 = arith.constant 0 : index
    %72 = vector.load %arg8[%c0_45, %c0_46] : memref<8x1xf32, #tpu.memory_space<vmem>>, vector<8x1xf32>
    tpu.vector_store %arg8[%c0_45, %c0_46], %71 {strides = array<i32>} : memref<8x1xf32, #tpu.memory_space<vmem>>, vector<8x1xf32>,
    %c2_47 = arith.constant 2 : index
    %c0_48 = arith.constant 0 : index
    %c0_49 = arith.constant 0 : index
    %73 = vector.load %arg2[%c2_47, %c0_48, %c0_49] : memref<4x8x128xf32, #tpu.memory_space<vmem>>, vector<1x8x128xf32>
    %74 = vector.shape_cast %73 : vector<1x8x128xf32> to vector<8x128xf32>
    %75 = vector.broadcast %1 : f32 to vector<8x128xf32>
    %76 = arith.mulf %74, %75 : vector<8x128xf32>
    %cst_50 = arith.constant dense<0xFF800000> : vector<8xf32>
    %77 = vector.multi_reduction <maximumf>, %76, %cst_50 [1] : vector<8x128xf32> to vector<8xf32>
    %78 = vector.shape_cast %77 : vector<8xf32> to vector<8x1xf32>
    %79 = vector.broadcast %78 : vector<8x1xf32> to vector<8x128xf32>
    %80 = arith.subf %76, %79 : vector<8x128xf32>
    %81 = math.exp %80 : vector<8x128xf32>
    %cst_51 = arith.constant dense<0.000000e+00> : vector<8xf32>
    %82 = vector.multi_reduction <add>, %81, %cst_51 [1] : vector<8x128xf32> to vector<8xf32>
    %83 = vector.shape_cast %82 : vector<8xf32> to vector<8x1xf32>
    %84 = math.log %83 : vector<8x1xf32>
    %c0_52 = arith.constant 0 : index
    %c0_53 = arith.constant 0 : index
    %c0_54 = arith.constant 0 : index
    %85 = vector.load %arg7[%c0_52, %c0_53, %c0_54] : memref<2x8x128xf32, #tpu.memory_space<vmem>>, vector<1x8x128xf32>
    %86 = vector.shape_cast %85 : vector<1x8x128xf32> to vector<8x128xf32>
    %c0_55 = arith.constant 0 : index
    %c0_56 = arith.constant 0 : index
    %87 = vector.load %arg8[%c0_55, %c0_56] : memref<8x1xf32, #tpu.memory_space<vmem>>, vector<8x1xf32>
    %cst_57 = arith.constant 2.000000e+00 : f32
    %88 = vector.broadcast %cst_57 : f32 to vector<8x1xf32>
    %89 = arith.mulf %88, %84 : vector<8x1xf32>
    %90 = arith.mulf %86, %80 : vector<8x128xf32>
    %cst_58 = arith.constant dense<0.000000e+00> : vector<8xf32>
    %91 = vector.multi_reduction <add>, %90, %cst_58 [1] : vector<8x128xf32> to vector<8xf32>
    %92 = vector.shape_cast %91 : vector<8xf32> to vector<8x1xf32>
    %93 = arith.subf %89, %92 : vector<8x1xf32>
    %94 = arith.addf %87, %93 : vector<8x1xf32>
    %c0_59 = arith.constant 0 : index
    %c0_60 = arith.constant 0 : index
    %95 = vector.load %arg8[%c0_59, %c0_60] : memref<8x1xf32, #tpu.memory_space<vmem>>, vector<8x1xf32>
    tpu.vector_store %arg8[%c0_59, %c0_60], %94 {strides = array<i32>} : memref<8x1xf32, #tpu.memory_space<vmem>>, vector<8x1xf32>,
    %c3 = arith.constant 3 : index
    %c0_61 = arith.constant 0 : index
    %c0_62 = arith.constant 0 : index
    %96 = vector.load %arg2[%c3, %c0_61, %c0_62] : memref<4x8x128xf32, #tpu.memory_space<vmem>>, vector<1x8x128xf32>
    %97 = vector.shape_cast %96 : vector<1x8x128xf32> to vector<8x128xf32>
    %98 = vector.broadcast %1 : f32 to vector<8x128xf32>
    %99 = arith.mulf %97, %98 : vector<8x128xf32>
    %cst_63 = arith.constant dense<0xFF800000> : vector<8xf32>
    %100 = vector.multi_reduction <maximumf>, %99, %cst_63 [1] : vector<8x128xf32> to vector<8xf32>
    %101 = vector.shape_cast %100 : vector<8xf32> to vector<8x1xf32>
    %102 = vector.broadcast %101 : vector<8x1xf32> to vector<8x128xf32>
    %103 = arith.subf %99, %102 : vector<8x128xf32>
    %104 = math.exp %103 : vector<8x128xf32>
    %cst_64 = arith.constant dense<0.000000e+00> : vector<8xf32>
    %105 = vector.multi_reduction <add>, %104, %cst_64 [1] : vector<8x128xf32> to vector<8xf32>
    %106 = vector.shape_cast %105 : vector<8xf32> to vector<8x1xf32>
    %107 = math.log %106 : vector<8x1xf32>
    %c0_65 = arith.constant 0 : index
    %c0_66 = arith.constant 0 : index
    %c0_67 = arith.constant 0 : index
    %108 = vector.load %arg7[%c0_65, %c0_66, %c0_67] : memref<2x8x128xf32, #tpu.memory_space<vmem>>, vector<1x8x128xf32>
    %109 = vector.shape_cast %108 : vector<1x8x128xf32> to vector<8x128xf32>
    %c0_68 = arith.constant 0 : index
    %c0_69 = arith.constant 0 : index
    %110 = vector.load %arg8[%c0_68, %c0_69] : memref<8x1xf32, #tpu.memory_space<vmem>>, vector<8x1xf32>
    %cst_70 = arith.constant 2.000000e+00 : f32
    %111 = vector.broadcast %cst_70 : f32 to vector<8x1xf32>
    %112 = arith.mulf %111, %107 : vector<8x1xf32>
    %113 = arith.mulf %109, %103 : vector<8x128xf32>
    %cst_71 = arith.constant dense<0.000000e+00> : vector<8xf32>
    %114 = vector.multi_reduction <add>, %113, %cst_71 [1] : vector<8x128xf32> to vector<8xf32>
    %115 = vector.shape_cast %114 : vector<8xf32> to vector<8x1xf32>
    %116 = arith.subf %112, %115 : vector<8x1xf32>
    %117 = arith.addf %110, %116 : vector<8x1xf32>
    %c0_72 = arith.constant 0 : index
    %c0_73 = arith.constant 0 : index
    %118 = vector.load %arg8[%c0_72, %c0_73] : memref<8x1xf32, #tpu.memory_space<vmem>>, vector<8x1xf32>
    tpu.vector_store %arg8[%c0_72, %c0_73], %117 {strides = array<i32>} : memref<8x1xf32, #tpu.memory_space<vmem>>, vector<8x1xf32>,
    %c0_i32_74 = arith.constant 0 : i32
    %119 = arith.cmpi eq, %arg0, %c0_i32_74 : i32
    %120 = arith.extui %119 : i1 to i32
    %c0_i32_75 = arith.constant 0 : i32
    %121 = arith.cmpi ne, %120, %c0_i32_75 : i32
    scf.if %121 {
      %c0_76 = arith.constant 0 : index
      %c0_77 = arith.constant 0 : index
      %122 = vector.load %arg8[%c0_76, %c0_77] : memref<8x1xf32, #tpu.memory_space<vmem>>, vector<8x1xf32>
      %123 = vector.shape_cast %122 : vector<8x1xf32> to vector<1x8x1xf32>
      %cst_78 = arith.constant dense<0.000000e+00> : vector<1xf32>
      %124 = vector.multi_reduction <add>, %123, %cst_78 [1, 2] : vector<1x8x1xf32> to vector<1xf32>
      %125 = vector.shape_cast %124 : vector<1xf32> to vector<1x1x1xf32>
      %126 = vector.extract %125[0, 0, 0] : f32 from vector<1x1x1xf32>
      %cst_79 = arith.constant 0.020833334 : f32
      %127 = arith.mulf %126, %cst_79 : f32
      %c0_80 = arith.constant 0 : index
      %c0_81 = arith.constant 0 : index
      %128 = memref.load %arg5[%c0_80, %c0_81] : memref<1x1xf32, #tpu.memory_space<smem>>
      memref.store %127, %arg5[%c0_80, %c0_81] : memref<1x1xf32, #tpu.memory_space<smem>>
    } else {
    }
    return
  }
  func.func @transform_0(%arg0: i32) -> i32 {
    %c0_i32 = arith.constant 0 : i32
    %c0_i32_0 = arith.constant 0 : i32
    return %c0_i32 : i32
  }
  func.func @transform_1(%arg0: i32) -> (i32, i32, i32) {
    %c0_i32 = arith.constant 0 : i32
    %c0_i32_0 = arith.constant 0 : i32
    %c0_i32_1 = arith.constant 0 : i32
    return %arg0, %c0_i32, %c0_i32_0 : i32, i32, i32
  }
  func.func @transform_2(%arg0: i32) -> (i32, i32, i32) {
    %c0_i32 = arith.constant 0 : i32
    %c0_i32_0 = arith.constant 0 : i32
    %c0_i32_1 = arith.constant 0 : i32
    %c0_i32_2 = arith.constant 0 : i32
    return %c0_i32, %c0_i32_0, %c0_i32_1 : i32, i32, i32
  }
  func.func @transform_3(%arg0: i32) -> (i32, i32) {
    %c0_i32 = arith.constant 0 : i32
    %c0_i32_0 = arith.constant 0 : i32
    %c0_i32_1 = arith.constant 0 : i32
    return %c0_i32, %c0_i32_0 : i32, i32
  }
  func.func @transform_4(%arg0: i32) -> (i32, i32) {
    %c0_i32 = arith.constant 0 : i32
    %c0_i32_0 = arith.constant 0 : i32
    %c0_i32_1 = arith.constant 0 : i32
    return %c0_i32, %c0_i32_0 : i32, i32
  }
  func.func @transform_5(%arg0: i32) -> (i32, i32) {
    %c0_i32 = arith.constant 0 : i32
    %c0_i32_0 = arith.constant 0 : i32
    %c0_i32_1 = arith.constant 0 : i32
    return %c0_i32, %c0_i32_0 : i32, i32
  }
}

</mosaic_0001>

<llo_original>
// kernel: tpu_custom_call.1
$region0: #{tpu_custom_call.1}
  #allocation0 [shape = 'u32[]', space=smem, size = 0x4, offset = 0x4, fixed_abs, tag = 'smem constant byte address 0x4 - core index']
  #allocation1 [shape = 'u32[144,128]{1,0:T(1,128)}', space=vmem, size = 0x12000, scoped, tag = 'internal scratch']
  #allocation2 [shape = 'f32[2,8,128]{2,1,0:T(8,128)}', space=vmem, size = 0x2000, scoped, tag = 'scratch operand']
  #allocation3 [shape = 'f32[8,1]{1,0:T(8,128)}', space=vmem, size = 0x1000, scoped, tag = 'scratch operand']
  %s0 = inlined_call_operand.hbm [shape: f32[3], index: 0, kind: input, shape index: {}]
  %s1 = inlined_call_operand.hbm [shape: f32[4,8,128], index: 1, kind: input, shape index: {}]
  %s2 = inlined_call_operand.hbm [shape: f32[2,8,128], index: 2, kind: input, shape index: {}]
  %s3 = inlined_call_operand.vmem [shape: f32[1,128], index: 3, kind: input, shape index: {}]
  %s4 = inlined_call_operand.hbm [shape: f32[1,1], index: 4, kind: output, shape index: {0}]
  %s5 = inlined_call_operand.hbm [shape: f32[1,128], index: 5, kind: output, shape index: {1}]
  %6 = xla_tuple %s4, %s5
  %s7 = sld [smem:[#allocation0]]
  $region54: #{tpu_custom_call.1} parent=0
    _
  %s9 = ssub.s32 1, %s7
  %s10 = scalar_select 0, %s9, %s7
  $region1: #{tpu_custom_call.1} parent=0
    #allocation4 [shape = 'u8[512]{0}', space=smem, size = 0x200, scoped, tag = 'input window, operand 0, single buffered']
    #allocation5 [shape = 's32[1]{0}', space=sflag, size = 0x4, scoped, tag = 'scoped memory for tpu_custom_call.1']
    #allocation6 [shape = 's32[1]{0}', space=sflag, size = 0x4, scoped, tag = 'scoped memory for tpu_custom_call.1']
    #allocation7 [shape = 's32[1]{0}', space=sflag, size = 0x4, scoped, tag = 'scoped memory for tpu_custom_call.1']
    #allocation8 [shape = 's32[1]{0}', space=sflag, size = 0x4, scoped, tag = 'scoped memory for tpu_custom_call.1']
    #allocation9 [shape = 'u8[16384]{0}', space=vmem, size = 0x4000, scoped, tag = 'input window, operand 1, single buffered']
    #allocation10 [shape = 'u8[8192]{0}', space=vmem, size = 0x2000, scoped, tag = 'input window, operand 2, single buffered']
    #allocation11 [shape = 's32[1]{0}', space=sflag, size = 0x4, scoped, tag = 'scoped memory for tpu_custom_call.1']
    #allocation12 [shape = 'u8[512]{0}', space=smem, size = 0x200, scoped, tag = 'output window, operand 0, single buffered']
    #allocation13 [shape = 'u8[512]{0}', space=vmem, size = 0x400, scoped, tag = 'output window, operand 1, single buffered']
    %11 = vsyncpa [#allocation7], 0
    %12 = vsyncpa [#allocation5], 0
    %13 = vsyncpa [#allocation11], 0
    %14 = vsyncpa [#allocation8], 0
    %15 = vsyncpa [#allocation6], 0
    // Predicated region
    $region2: #{tpu_custom_call.1} parent=1 // pred_check
      _
    $region3: #{tpu_custom_call.1} parent=1 // pred_check_branch
      %17 = sbr.rel (0) target = $region5
    $region4: #{tpu_custom_call.1} parent=1 // pred_region
      %s19 = ssub.s32 16, 16
      %20 = vsyncadd [#allocation7], %s19
      %23 = dma.hbm_to_smem %s0, 16, [#allocation4], [#allocation7]
    $region5: #{tpu_custom_call.1} parent=1 // pred_fallthru
      _
    // Predicated region
    $region6: #{tpu_custom_call.1} parent=1 // pred_check
      _
    $region7: #{tpu_custom_call.1} parent=1 // pred_check_branch
      %25 = sbr.rel (0) target = $region9
    $region8: #{tpu_custom_call.1} parent=1 // pred_region
      %s27 = ssub.s32 512, 512
      %28 = vsyncadd [#allocation5], %s27
      %s29 = sshll.u32 [#allocation9], 4
      %s30 = int_to_ptr.vmem [resolvable:$true] %s29
      %35 = dma.hbm_to_vmem [thread:$0]  %s1, 512, %s30, [#allocation5], 128, 128, 8
    $region9: #{tpu_custom_call.1} parent=1 // pred_fallthru
      _
    // Predicated region
    $region10: #{tpu_custom_call.1} parent=1 // pred_check
      _
    $region11: #{tpu_custom_call.1} parent=1 // pred_check_branch
      %37 = sbr.rel (0) target = $region13
    $region12: #{tpu_custom_call.1} parent=1 // pred_region
      %s39 = ssub.s32 256, 256
      %40 = vsyncadd [#allocation11], %s39
      %s41 = sshll.u32 [#allocation10], 4
      %s42 = int_to_ptr.vmem [resolvable:$true] %s41
      %47 = dma.hbm_to_vmem [thread:$0]  %s2, 256, %s42, [#allocation11], 128, 128, 8
    $region13: #{tpu_custom_call.1} parent=1 // pred_fallthru
      _
    // Predicated region
    $region14: #{tpu_custom_call.1} parent=1 // pred_check
      _
    $region15: #{tpu_custom_call.1} parent=1 // pred_check_branch
      %49 = sbr.rel (0) target = $region17
    $region16: #{tpu_custom_call.1} parent=1 // pred_region
      _
    $region17: #{tpu_custom_call.1} parent=1 // pred_fallthru
      _
    // Predicated region
    $region18: #{tpu_custom_call.1} parent=1 // pred_check
      _
    $region19: #{tpu_custom_call.1} parent=1 // pred_check_branch
      %51 = sbr.rel (0) target = $region21
    $region20: #{tpu_custom_call.1} parent=1 // pred_region
      %52 = dma.done [#allocation7], 16
    $region21: #{tpu_custom_call.1} parent=1 // pred_fallthru
      _
    // Predicated region
    $region22: #{tpu_custom_call.1} parent=1 // pred_check
      _
    $region23: #{tpu_custom_call.1} parent=1 // pred_check_branch
      %54 = sbr.rel (0) target = $region25
    $region24: #{tpu_custom_call.1} parent=1 // pred_region
      %55 = dma.done [#allocation5], 512
    $region25: #{tpu_custom_call.1} parent=1 // pred_fallthru
      _
    // Predicated region
    $region26: #{tpu_custom_call.1} parent=1 // pred_check
      _
    $region27: #{tpu_custom_call.1} parent=1 // pred_check_branch
      %57 = sbr.rel (0) target = $region29
    $region28: #{tpu_custom_call.1} parent=1 // pred_region
      %58 = dma.done [#allocation11], 256
    $region29: #{tpu_custom_call.1} parent=1 // pred_fallthru
      _
    %59 = sfence
    %s60 = sld [smem:[#allocation4]]
    %s61 = sld [smem:[#allocation4 + $0x1]]
    %s62 = sld [smem:[#allocation4 + $0x2]]
    %p63 = scmp.eq.s32.totalorder 0, 0
    // Predicated region
    $region30: #{tpu_custom_call.1} parent=1 // pred_check
      %p64 = pneg %p63
    $region31: #{tpu_custom_call.1} parent=1 // pred_check_branch
      %66 = sbr.rel (%p64) target = $region33
    $region32: #{tpu_custom_call.1} parent=1 // pred_region
      %v67 = vld [vmem:[#allocation10] sm:$0xff]
      %v68 = vld [vmem:[#allocation10 + $0x8] sm:$0xff]
      %v69 = vld [vmem:[%s3] sm:$0x1]
      %v71 = vlaneseq
      %v72 = vshrl.u32 %v71, 7
      %v73 = vsub.s32 0, %v72
      %v74 = vrot.slane %v69, %v73
      %v76 = vsub.f32 %v67, %v74
      %v77 = vsub.f32 %v68, %v74
      %v78 = vstv %s60
      %v79 = vmul.f32 %v76, %v78
      %v80 = vmul.f32 %v77, %v78
      %81 = vmax.xlane.f32.xlu0 %v79
      %v82 = vpop.xlane.xlu0 %81
      %83 = vmax.xlane.f32.xlu0 %v80
      %v84 = vpop.xlane.xlu0 %83
      %v85 = vsub.f32 %v79, %v82
      %v86 = vsub.f32 %v80, %v84
      %v87 = vmul.f32 %v85, 1.442695
      %v88 = vpow.pop %v87
      %v89 = vmul.f32 %v86, 1.442695
      %v90 = vpow.pop %v89
      %91 = vadd.xlane.f32.xlu0 %v88
      %v92 = vpop.xlane.xlu0 %91
      %93 = vadd.xlane.f32.xlu0 %v90
      %v94 = vpop.xlane.xlu0 %93
      %v95 = vrcp.pop %v92
      %v96 = vrcp.pop %v94
      %v97 = vmul.f32 %v88, %v95
      %v98 = vmul.f32 %v90, %v96
      %v99 = vadd.f32 %v97, %v98
      %100 = vst [vmem:[#allocation2] sm:$0xff] %v99
      %s101 = scalar_lea.vmem [#allocation2], 8
      %102 = vst [vmem:[%s101] sm:$0xff] %v97
      %vm103 = vcmask 7168
      %104 = vst.msk [vmem:[#allocation3] sm:$0xff] %vm103, 0.0
      %v105 = vadd.f32 %v67, %v68
      %v106 = vrot.slane %v105, 4
      %v107 = vadd.f32 %v105, %v106
      %v108 = vrot.slane %v107, 2
      %v109 = vadd.f32 %v107, %v108
      %v110 = vrot.slane %v109, 1
      %v111 = vadd.f32 %v109, %v110
      %v112 = vmul.f32 %v111, 0.0625
      %v113 = vstv %s62
      %v114 = vmul.f32 %v69, %v113
      %s115 = ssub.f32 1.0, %s62
      %v116 = vstv %s115
      %v117 = vmul.f32 %v112, %v116
      %v118 = vadd.f32 %v114, %v117
      %119 = vst [vmem:[#allocation13] sm:$0x1] %v118
    $region33: #{tpu_custom_call.1} parent=1 // pred_fallthru
      _
    %v120 = vld [vmem:[#allocation9] sm:$0xff]
    %v121 = vstv %s61
    %v122 = vmul.f32 %v120, %v121
    %123 = vmax.xlane.f32.xlu0 %v122
    %v124 = vpop.xlane.xlu0 %123
    %v125 = vsub.f32 %v122, %v124
    %v126 = vmul.f32 %v125, 1.442695
    %v127 = vpow.pop %v126
    %128 = vadd.xlane.f32.xlu0 %v127
    %v129 = vpop.xlane.xlu0 %128
    %v130 = vlog2.pop %v129
    %v131 = vmul.f32 %v130, 0.6931472
    %v132 = vld [vmem:[#allocation2] sm:$0xff]
    %v133 = vld [vmem:[#allocation3] sm:$0xff]
    %v134 = vmul.f32 %v131, 2.0
    %v135 = vmul.f32 %v132, %v125
    %136 = vadd.xlane.f32.xlu0 %v135
    %v137 = vpop.xlane.xlu0 %136
    %v138 = vsub.f32 %v134, %v137
    %v139 = vadd.f32 %v133, %v138
    %vm140 = vcmask 7168
    %141 = vst.msk [vmem:[#allocation3] sm:$0xff] %vm140, %v139
    %v142 = vld [vmem:[#allocation3] sm:$0xff]
    %s143 = scalar_lea.vmem [#allocation2], 8
    %v144 = vld [vmem:[%s143] sm:$0xff]
    %v145 = vmul.f32 %v144, %v125
    %146 = vadd.xlane.f32.xlu0 %v145
    %v147 = vpop.xlane.xlu0 %146
    %v148 = vsub.f32 %v147, %v131
    %v149 = vadd.f32 %v142, %v148
    %150 = vst.msk [vmem:[#allocation3] sm:$0xff] %vm140, %v149
    %s151 = scalar_lea.vmem [#allocation9], 8
    %v152 = vld [vmem:[%s151] sm:$0xff]
    %v153 = vmul.f32 %v152, %v121
    %154 = vmax.xlane.f32.xlu0 %v153
    %v155 = vpop.xlane.xlu0 %154
    %v156 = vsub.f32 %v153, %v155
    %v157 = vmul.f32 %v156, 1.442695
    %v158 = vpow.pop %v157
    %159 = vadd.xlane.f32.xlu0 %v158
    %v160 = vpop.xlane.xlu0 %159
    %v161 = vlog2.pop %v160
    %v162 = vmul.f32 %v161, 0.6931472
    %v163 = vld [vmem:[#allocation2] sm:$0xff]
    %v164 = vld [vmem:[#allocation3] sm:$0xff]
    %v165 = vmul.f32 %v162, 2.0
    %v166 = vmul.f32 %v163, %v156
    %167 = vadd.xlane.f32.xlu0 %v166
    %v168 = vpop.xlane.xlu0 %167
    %v169 = vsub.f32 %v165, %v168
    %v170 = vadd.f32 %v164, %v169
    %171 = vst.msk [vmem:[#allocation3] sm:$0xff] %vm140, %v170
    %v172 = vld [vmem:[#allocation2] sm:$0xff]
    %v173 = vld [vmem:[%s143] sm:$0xff]
    %v174 = vsub.f32 %v172, %v173
    %v175 = vld [vmem:[#allocation3] sm:$0xff]
    %v176 = vmul.f32 %v174, %v156
    %177 = vadd.xlane.f32.xlu0 %v176
    %v178 = vpop.xlane.xlu0 %177
    %v179 = vsub.f32 %v178, %v162
    %v180 = vadd.f32 %v175, %v179
    %181 = vst.msk [vmem:[#allocation3] sm:$0xff] %vm140, %v180
    %s182 = scalar_lea.vmem [#allocation9], 16
    %v183 = vld [vmem:[%s182] sm:$0xff]
    %v184 = vmul.f32 %v183, %v121
    %185 = vmax.xlane.f32.xlu0 %v184
    %v186 = vpop.xlane.xlu0 %185
    %v187 = vsub.f32 %v184, %v186
    %v188 = vmul.f32 %v187, 1.442695
    %v189 = vpow.pop %v188
    %190 = vadd.xlane.f32.xlu0 %v189
    %v191 = vpop.xlane.xlu0 %190
    %v192 = vlog2.pop %v191
    %v193 = vmul.f32 %v192, 0.6931472
    %v194 = vld [vmem:[#allocation2] sm:$0xff]
    %v195 = vld [vmem:[#allocation3] sm:$0xff]
    %v196 = vmul.f32 %v193, 2.0
    %v197 = vmul.f32 %v194, %v187
    %198 = vadd.xlane.f32.xlu0 %v197
    %v199 = vpop.xlane.xlu0 %198
    %v200 = vsub.f32 %v196, %v199
    %v201 = vadd.f32 %v195, %v200
    %202 = vst.msk [vmem:[#allocation3] sm:$0xff] %vm140, %v201
    %s203 = scalar_lea.vmem [#allocation9], 24
    %v204 = vld [vmem:[%s203] sm:$0xff]
    %v205 = vmul.f32 %v204, %v121
    %206 = vmax.xlane.f32.xlu0 %v205
    %v207 = vpop.xlane.xlu0 %206
    %v208 = vsub.f32 %v205, %v207
    %v209 = vmul.f32 %v208, 1.442695
    %v210 = vpow.pop %v209
    %211 = vadd.xlane.f32.xlu0 %v210
    %v212 = vpop.xlane.xlu0 %211
    %v213 = vlog2.pop %v212
    %v214 = vmul.f32 %v213, 0.6931472
    %v215 = vld [vmem:[#allocation2] sm:$0xff]
    %v216 = vld [vmem:[#allocation3] sm:$0xff]
    %v217 = vmul.f32 %v214, 2.0
    %v218 = vmul.f32 %v215, %v208
    %219 = vadd.xlane.f32.xlu0 %v218
    %v220 = vpop.xlane.xlu0 %219
    %v221 = vsub.f32 %v217, %v220
    %v222 = vadd.f32 %v216, %v221
    %223 = vst.msk [vmem:[#allocation3] sm:$0xff] %vm140, %v222
    // Predicated region
    $region34: #{tpu_custom_call.1} parent=1 // pred_check
      %p224 = pneg %p63
    $region35: #{tpu_custom_call.1} parent=1 // pred_check_branch
      %226 = sbr.rel (%p224) target = $region37
    $region36: #{tpu_custom_call.1} parent=1 // pred_region
      %v227 = vld [vmem:[#allocation3] sm:$0xff]
      %v228 = vsel %vm140, %v227, 0.0
      %229 = vadd.xlane.f32.xlu0 %v228
      %v230 = vpop.xlane.xlu0 %229
      %v231 = vrot.slane %v230, 4
      %v232 = vadd.f32 %v230, %v231
      %v233 = vrot.slane %v232, 2
      %v234 = vadd.f32 %v232, %v233
      %v235 = vrot.slane %v234, 1
      %v236 = vadd.f32 %v234, %v235
      %s237 = vtos %v236
      %s238 = smul.f32 %s237, 0.020833334
      %s239 = scalar_lea.smem [#allocation12], 0
      %240 = sst [smem:[%s239]] %s238
    $region37: #{tpu_custom_call.1} parent=1 // pred_fallthru
      _
    // Predicated region
    $region38: #{tpu_custom_call.1} parent=1 // pred_check
      _
    $region39: #{tpu_custom_call.1} parent=1 // pred_check_branch
      %242 = sbr.rel (0) target = $region41
    $region40: #{tpu_custom_call.1} parent=1 // pred_region
      %s244 = ssub.s32 16, 16
      %245 = vsyncadd [#allocation8], %s244
      %248 = dma.smem_to_hbm [#allocation12], 16, %s4, [#allocation8]
    $region41: #{tpu_custom_call.1} parent=1 // pred_fallthru
      _
    // Predicated region
    $region42: #{tpu_custom_call.1} parent=1 // pred_check
      _
    $region43: #{tpu_custom_call.1} parent=1 // pred_check_branch
      %250 = sbr.rel (0) target = $region45
    $region44: #{tpu_custom_call.1} parent=1 // pred_region
      %s252 = ssub.s32 16, 16
      %253 = vsyncadd [#allocation6], %s252
      %s255 = sshll.u32 [#allocation13], 4
      %s256 = int_to_ptr.vmem [resolvable:$true] %s255
      %258 = dma.vmem_to_hbm [thread:$0]  %s256, 16, %s5, [#allocation6]
    $region45: #{tpu_custom_call.1} parent=1 // pred_fallthru
      _
    // Predicated region
    $region46: #{tpu_custom_call.1} parent=1 // pred_check
      _
    $region47: #{tpu_custom_call.1} parent=1 // pred_check_branch
      %260 = sbr.rel (0) target = $region49
    $region48: #{tpu_custom_call.1} parent=1 // pred_region
      %261 = dma.done [#allocation8], 16
    $region49: #{tpu_custom_call.1} parent=1 // pred_fallthru
      _
    // Predicated region
    $region50: #{tpu_custom_call.1} parent=1 // pred_check
      _
    $region51: #{tpu_custom_call.1} parent=1 // pred_check_branch
      %263 = sbr.rel (0) target = $region53
    $region52: #{tpu_custom_call.1} parent=1 // pred_region
      %264 = dma.done [#allocation6], 16
    $region53: #{tpu_custom_call.1} parent=1 // pred_fallthru
      _
    %265 = sfence
    %266 = vsyncpa [#allocation5], 1
    %267 = vsyncpa [#allocation11], 1
    %268 = vsyncpa [#allocation6], 1
    %269 = vsyncpa [#allocation7], 1
    %270 = vsyncpa [#allocation8], 1

</llo_original>
